<compile_context>
chip_gen: v6e
topology: v6e:2x2x1
jax: 0.10.0
libtpu: 0.0.40
codegen_flags: <defaults>
</compile_context>

<pallas_src>
import jax
import jax.numpy as jnp
from jax.experimental import pallas as pl
from jax.experimental.pallas import tpu as pltpu


def _round_up(x, m):
    return ((x + m - 1) // m) * m


def actor_kernel(xT_ref, w1_ref, b1_ref, w2_ref, b2_ref, w3_ref, b3_ref, o_ref):
    # xT_ref: [F, T]  (batch on lanes);  w*: [out, in];  b*: [out, 1]
    xT = xT_ref[...]
    h1 = jnp.dot(w1_ref[...], xT, preferred_element_type=jnp.float32)
    h1 = jnp.maximum(h1 + b1_ref[...], 0.0)                       # [32, T]
    h2 = jnp.dot(w2_ref[...], h1, preferred_element_type=jnp.float32)
    h2 = jnp.maximum(h2 + b2_ref[...], 0.0)                       # [32, T]
    y = jnp.dot(w3_ref[...], h2, preferred_element_type=jnp.float32)
    y = y + b3_ref[...]                                           # [O, T]
    o_ref[...] = (2.0 * jax.nn.sigmoid(y)).astype(o_ref.dtype)


def actor_forward(x, params, *, batch_tile=2048):
    """Run the actor MLP on a batch of observations.

    x: [B, input_size] float32 (any B; padded internally)
    params: PyTorch-layout weights
        w1 [32, in],  b1 [32, 1]
        w2 [32, 32],  b2 [32, 1]
        w3 [out, 32], b3 [out, 1]
    Returns [B, output_size] float32.
    """
    w1, b1 = params["w1"], params["b1"]
    w2, b2 = params["w2"], params["b2"]
    w3, b3 = params["w3"], params["b3"]

    B, F = x.shape
    H1 = w1.shape[0]
    H2 = w2.shape[0]
    O = w3.shape[0]

    assert batch_tile % 128 == 0, "batch_tile must be a multiple of 128 (lanes)"
    # Shrink the tile for small batches so the grid still has >= 2 steps
    # (megacore) without padding a tiny batch up to a huge tile.
    bt = min(batch_tile, max(128, _round_up(max(B // 2, 1), 128)))
    Bp = _round_up(B, bt)
    grid = (Bp // bt,)

    # Batch-on-lanes layout: pad batch to a tile multiple, then transpose.
    if Bp != B:
        x = jnp.pad(x, ((0, Bp - B), (0, 0)))
    xT = x.T                                      # [F, Bp], lane-dense batch

    outT = pl.pallas_call(
        actor_kernel,
        out_shape=jax.ShapeDtypeStruct((O, Bp), jnp.float32),
        grid_spec=pltpu.PrefetchScalarGridSpec(
            num_scalar_prefetch=0,
            grid=grid,
            in_specs=[
                # x^T: tiled along the (lane) batch axis
                pl.BlockSpec((F, bt), lambda i: (0, i)),
                # weights / biases: full arrays, VMEM-resident every step
                pl.BlockSpec((H1, F), lambda i: (0, 0)),
                pl.BlockSpec((H1, 1), lambda i: (0, 0)),
                pl.BlockSpec((H2, H1), lambda i: (0, 0)),
                pl.BlockSpec((H2, 1), lambda i: (0, 0)),
                pl.BlockSpec((O, H2), lambda i: (0, 0)),
                pl.BlockSpec((O, 1), lambda i: (0, 0)),
            ],
            out_specs=pl.BlockSpec((O, bt), lambda i: (0, i)),
        ),
        compiler_params=pltpu.CompilerParams(
            dimension_semantics=("parallel",),
        ),
    )(xT, w1, b1, w2, b2, w3, b3)

    # Back to [B, O]; drop batch padding.
    return outT[:, :B].T


def init_params(key, input_size, output_size, hidden=32):
    """Deterministic init mimicking torch.nn.Linear default (U[-1/sqrt(fan_in), +1/sqrt(fan_in)])."""
    ks = jax.random.split(key, 6)

    def lin(kw, kb, fan_in, fan_out):
        bound = 1.0 / float(fan_in) ** 0.5
        w = jax.random.uniform(kw, (fan_out, fan_in), jnp.float32, -bound, bound)
        b = jax.random.uniform(kb, (fan_out, 1), jnp.float32, -bound, bound)
        return w, b

    w1, b1 = lin(ks[0], ks[1], input_size, hidden)
    w2, b2 = lin(ks[2], ks[3], hidden, hidden)
    w3, b3 = lin(ks[4], ks[5], hidden, output_size)
    return dict(w1=w1, b1=b1, w2=w2, b2=b2, w3=w3, b3=b3)


def actor_forward_ref(x, p):
    """Pure-JAX reference of the PyTorch forward."""
    h1 = jnp.maximum(x @ p["w1"].T + p["b1"].T, 0.0)
    h2 = jnp.maximum(h1 @ p["w2"].T + p["b2"].T, 0.0)
    return 2.0 * jax.nn.sigmoid(h2 @ p["w3"].T + p["b3"].T)


if __name__ == "__main__":
    # Pendulum-v1: observation dim = 3, action dim = 1.
    input_size, output_size = 3, 1
    batch = 200  # deliberately NOT a multiple of the tile -> exercises padding path

    key = jax.random.PRNGKey(0)
    k_params, k_x = jax.random.split(key)
    params = init_params(k_params, input_size, output_size)
    x = jax.random.normal(k_x, (batch, input_size), jnp.float32)

    out = actor_forward(x, params)
    out = jax.block_until_ready(out)

    ref = actor_forward_ref(x, params)
    assert out.shape == (batch, output_size)
    assert jnp.allclose(out, ref, atol=1e-5, rtol=1e-5), "mismatch vs reference"

    print("KERNEL_OK")
</pallas_src>

<mosaic_0001>
module attributes {stable_mosaic.version = 11 : i64} {
  func.func @actor_kernel(%arg0: i32, %arg1: memref<3x128xf32, #tpu.memory_space<vmem>>, %arg2: memref<32x3xf32, #tpu.memory_space<vmem>>, %arg3: memref<32x1xf32, #tpu.memory_space<vmem>>, %arg4: memref<32x32xf32, #tpu.memory_space<vmem>>, %arg5: memref<32x1xf32, #tpu.memory_space<vmem>>, %arg6: memref<1x32xf32, #tpu.memory_space<vmem>>, %arg7: memref<1x1xf32, #tpu.memory_space<vmem>>, %arg8: memref<1x128xf32, #tpu.memory_space<vmem>>) attributes {dimension_semantics = [#tpu.dimension_semantics<parallel>], iteration_bounds = array<i64: 2>, scalar_prefetch = 0 : i64, scratch_operands = 0 : i64, tpu.core_type = #tpu.core_type<tc>, window_params = [{transform_indices = @transform_0, window_bounds = array<i64: 3, 128>}, {pipeline_mode = #tpu.pipeline_mode<synchronous>, transform_indices = @transform_1, window_bounds = array<i64: 32, 3>}, {pipeline_mode = #tpu.pipeline_mode<synchronous>, transform_indices = @transform_2, window_bounds = array<i64: 32, 1>}, {pipeline_mode = #tpu.pipeline_mode<synchronous>, transform_indices = @transform_3, window_bounds = array<i64: 32, 32>}, {pipeline_mode = #tpu.pipeline_mode<synchronous>, transform_indices = @transform_4, window_bounds = array<i64: 32, 1>}, {pipeline_mode = #tpu.pipeline_mode<synchronous>, transform_indices = @transform_5, window_bounds = array<i64: 1, 32>}, {pipeline_mode = #tpu.pipeline_mode<synchronous>, transform_indices = @transform_6, window_bounds = array<i64: 1, 1>}, {transform_indices = @transform_7, window_bounds = array<i64: 1, 128>}]} {
    %c0 = arith.constant 0 : index
    %c0_0 = arith.constant 0 : index
    %0 = vector.load %arg1[%c0, %c0_0] : memref<3x128xf32, #tpu.memory_space<vmem>>, vector<3x128xf32>
    %c0_1 = arith.constant 0 : index
    %c0_2 = arith.constant 0 : index
    %1 = vector.load %arg2[%c0_1, %c0_2] : memref<32x3xf32, #tpu.memory_space<vmem>>, vector<32x3xf32>
    %cst = arith.constant dense<0.000000e+00> : vector<32x128xf32>
    %2 = tpu.matmul %1, %0, %cst {dimension_numbers = #tpu.dot_dimension_numbers<[1], [0], [0], [1], [0, 0, 1, 1], [], []>} : vector<32x3xf32>, vector<3x128xf32>, vector<32x128xf32> -> vector<32x128xf32>
    %c0_3 = arith.constant 0 : index
    %c0_4 = arith.constant 0 : index
    %3 = vector.load %arg3[%c0_3, %c0_4] : memref<32x1xf32, #tpu.memory_space<vmem>>, vector<32x1xf32>
    %4 = vector.broadcast %3 : vector<32x1xf32> to vector<32x128xf32>
    %5 = arith.addf %2, %4 : vector<32x128xf32>
    %cst_5 = arith.constant 0.000000e+00 : f32
    %6 = vector.broadcast %cst_5 : f32 to vector<32x128xf32>
    %7 = arith.maximumf %5, %6 : vector<32x128xf32>
    %c0_6 = arith.constant 0 : index
    %c0_7 = arith.constant 0 : index
    %8 = vector.load %arg4[%c0_6, %c0_7] : memref<32x32xf32, #tpu.memory_space<vmem>>, vector<32x32xf32>
    %cst_8 = arith.constant dense<0.000000e+00> : vector<32x128xf32>
    %9 = tpu.matmul %8, %7, %cst_8 {dimension_numbers = #tpu.dot_dimension_numbers<[1], [0], [0], [1], [0, 0, 1, 1], [], []>} : vector<32x32xf32>, vector<32x128xf32>, vector<32x128xf32> -> vector<32x128xf32>
    %c0_9 = arith.constant 0 : index
    %c0_10 = arith.constant 0 : index
    %10 = vector.load %arg5[%c0_9, %c0_10] : memref<32x1xf32, #tpu.memory_space<vmem>>, vector<32x1xf32>
    %11 = vector.broadcast %10 : vector<32x1xf32> to vector<32x128xf32>
    %12 = arith.addf %9, %11 : vector<32x128xf32>
    %cst_11 = arith.constant 0.000000e+00 : f32
    %13 = vector.broadcast %cst_11 : f32 to vector<32x128xf32>
    %14 = arith.maximumf %12, %13 : vector<32x128xf32>
    %c0_12 = arith.constant 0 : index
    %c0_13 = arith.constant 0 : index
    %15 = vector.load %arg6[%c0_12, %c0_13] : memref<1x32xf32, #tpu.memory_space<vmem>>, vector<1x32xf32>
    %cst_14 = arith.constant dense<0.000000e+00> : vector<1x128xf32>
    %16 = tpu.matmul %15, %14, %cst_14 {dimension_numbers = #tpu.dot_dimension_numbers<[1], [0], [0], [1], [0, 0, 1, 1], [], []>} : vector<1x32xf32>, vector<32x128xf32>, vector<1x128xf32> -> vector<1x128xf32>
    %c0_15 = arith.constant 0 : index
    %c0_16 = arith.constant 0 : index
    %17 = vector.load %arg7[%c0_15, %c0_16] : memref<1x1xf32, #tpu.memory_space<vmem>>, vector<1x1xf32>
    %18 = vector.broadcast %17 : vector<1x1xf32> to vector<1x128xf32>
    %19 = arith.addf %16, %18 : vector<1x128xf32>
    %20 = arith.negf %19 : vector<1x128xf32>
    %21 = math.exp %20 : vector<1x128xf32>
    %cst_17 = arith.constant 1.000000e+00 : f32
    %22 = vector.broadcast %cst_17 : f32 to vector<1x128xf32>
    %23 = arith.addf %22, %21 : vector<1x128xf32>
    %24 = arith.divf %22, %23 : vector<1x128xf32>
    %cst_18 = arith.constant 2.000000e+00 : f32
    %25 = vector.broadcast %cst_18 : f32 to vector<1x128xf32>
    %26 = arith.mulf %25, %24 : vector<1x128xf32>
    %c0_19 = arith.constant 0 : index
    %c0_20 = arith.constant 0 : index
    %27 = vector.load %arg8[%c0_19, %c0_20] : memref<1x128xf32, #tpu.memory_space<vmem>>, vector<1x128xf32>
    tpu.vector_store %arg8[%c0_19, %c0_20], %26 {strides = array<i32>} : memref<1x128xf32, #tpu.memory_space<vmem>>, vector<1x128xf32>,
    return
  }
  func.func @transform_0(%arg0: i32) -> (i32, i32) {
    %c0_i32 = arith.constant 0 : i32
    %c0_i32_0 = arith.constant 0 : i32
    return %c0_i32, %arg0 : i32, i32
  }
  func.func @transform_1(%arg0: i32) -> (i32, i32) {
    %c0_i32 = arith.constant 0 : i32
    %c0_i32_0 = arith.constant 0 : i32
    %c0_i32_1 = arith.constant 0 : i32
    return %c0_i32, %c0_i32_0 : i32, i32
  }
  func.func @transform_2(%arg0: i32) -> (i32, i32) {
    %c0_i32 = arith.constant 0 : i32
    %c0_i32_0 = arith.constant 0 : i32
    %c0_i32_1 = arith.constant 0 : i32
    return %c0_i32, %c0_i32_0 : i32, i32
  }
  func.func @transform_3(%arg0: i32) -> (i32, i32) {
    %c0_i32 = arith.constant 0 : i32
    %c0_i32_0 = arith.constant 0 : i32
    %c0_i32_1 = arith.constant 0 : i32
    return %c0_i32, %c0_i32_0 : i32, i32
  }
  func.func @transform_4(%arg0: i32) -> (i32, i32) {
    %c0_i32 = arith.constant 0 : i32
    %c0_i32_0 = arith.constant 0 : i32
    %c0_i32_1 = arith.constant 0 : i32
    return %c0_i32, %c0_i32_0 : i32, i32
  }
  func.func @transform_5(%arg0: i32) -> (i32, i32) {
    %c0_i32 = arith.constant 0 : i32
    %c0_i32_0 = arith.constant 0 : i32
    %c0_i32_1 = arith.constant 0 : i32
    return %c0_i32, %c0_i32_0 : i32, i32
  }
  func.func @transform_6(%arg0: i32) -> (i32, i32) {
    %c0_i32 = arith.constant 0 : i32
    %c0_i32_0 = arith.constant 0 : i32
    %c0_i32_1 = arith.constant 0 : i32
    return %c0_i32, %c0_i32_0 : i32, i32
  }
  func.func @transform_7(%arg0: i32) -> (i32, i32) {
    %c0_i32 = arith.constant 0 : i32
    %c0_i32_0 = arith.constant 0 : i32
    return %c0_i32, %arg0 : i32, i32
  }
}

</mosaic_0001>

<llo_original>
// kernel: tpu_custom_call.1
$region0: #{tpu_custom_call.1}
  #allocation0 [shape = 'u32[]', space=smem, size = 0x4, offset = 0x4, fixed_abs, tag = 'smem constant byte address 0x4 - core index']
  #allocation1 [shape = 'u32[144,128]{1,0:T(1,128)}', space=vmem, size = 0x12000, scoped, tag = 'internal scratch']
  #allocation2 [shape = 'f32[1,1]{1,0:T(1,128)S(1)}', space=vmem, size = 0x200, scoped, tag = 'scoped memory for tpu_custom_call.1']
  %s0 = inlined_call_operand.vmem [shape: f32[3,256], index: 0, kind: input, shape index: {}]
  %s1 = inlined_call_operand.vmem [shape: f32[32,3], index: 1, kind: input, shape index: {}]
  %s2 = inlined_call_operand.vmem [shape: f32[32,1], index: 2, kind: input, shape index: {}]
  %s3 = inlined_call_operand.vmem [shape: f32[32,32], index: 3, kind: input, shape index: {}]
  %s4 = inlined_call_operand.vmem [shape: f32[32,1], index: 4, kind: input, shape index: {}]
  %s5 = inlined_call_operand.vmem [shape: f32[1,32], index: 5, kind: input, shape index: {}]
  %s6 = inlined_call_operand.<no memory space> [shape: f32[1,1], index: 6, kind: input, shape index: {}]
  %s7 = inlined_call_operand.hbm [shape: f32[1,256], index: 7, kind: output, shape index: {}]
  %s8 = sld [smem:[#allocation0]]
  $region61: #{tpu_custom_call.1} parent=0
    _
  %s10 = ssub.s32 1, %s8
  %s11 = scalar_select 0, %s10, %s8
  %v12 = vstv %s6
  %13 = vst [vmem:[#allocation2] sm:$0x1] %v12
  $region1: #{tpu_custom_call.1} parent=0
    #allocation3 [shape = 'u8[1024]{0}', space=vmem, size = 0x400, scoped, tag = 'output window, operand 0']
    #allocation4 [shape = 's32[2]{0}', space=sflag, size = 0x8, scoped, tag = 'scoped memory for tpu_custom_call.1']
    %14 = vsyncpa [#allocation4], 0
    %s15 = scalar_lea.sflag [#allocation4], 1
    %16 = vsyncpa %s15, 0
    loop: start=0, step=1, limit=4
    $region2: #{tpu_custom_call.1} parent=1 // loop_pre_header
      _
    $region3: #{tpu_custom_call.1} parent=1 // loop_header
      %s18 = sphi 0, %s22
      %p19 = scmp.ge.s32.totalorder %s18, 4
      %s28 = sphi 0, %s30
      %s31 = sphi 0, %s28
      %s32 = sphi 0, %s31
      %s48 = sphi 0, %s32
      %s52 = sphi 0, %s52
      %s54 = sphi 0, %s52
      %s55 = sphi 0, %s54
      %s69 = sphi 0, %s55
      %s73 = sphi 0, %s73
      %s75 = sphi 0, %s73
      %s76 = sphi 0, %s75
      %s90 = sphi 0, %s76
      %s94 = sphi 0, %s94
      %s96 = sphi 0, %s94
      %s97 = sphi 0, %s96
      %s111 = sphi 0, %s97
      %s115 = sphi 0, %s115
      %s117 = sphi 0, %s115
      %s118 = sphi 0, %s117
      %s132 = sphi 0, %s118
      %s136 = sphi 0, %s136
      %s138 = sphi 0, %s136
      %s139 = sphi 0, %s138
      %s153 = sphi 0, %s139
      %s157 = sphi 0, %s157
      %s159 = sphi 0, %s157
      %s160 = sphi 0, %s159
      %s174 = sphi 0, %s160
      %s180 = sphi 0, %s182
      %s183 = sphi 0, %s180
      %s184 = sphi 0, %s183
      %s200 = sphi 0, %s184
    $region4: #{tpu_custom_call.1} parent=1 // loop_header_branch
      %21 = sbr.rel (%p19) target = $region8
    $region5: #{tpu_custom_call.1} parent=1 // loop_body
      %s23 = ssub.s32 %s18, 1
      %s24 = ssub.s32 %s18, 2
      %s25 = sadd.s32 %s18, 1
      %s26 = ssub.s32 %s18, %s25
      %p27 = scmp.eq.s32.totalorder %s26, 0
      %s29 = sadd.s32 %s28, 1
      %s30 = scalar_select %p27, %s28, %s29
      %p33 = pneg %p27
      %p34 = scmp.eq.s32.totalorder %s18, 1
      %p35 = por %p33, %p34
      %p36 = scmp.ne.s32.totalorder %s28, %s31
      %p37 = scmp.eq.s32.totalorder %s18, 0
      %p38 = por %p36, %p37
      %p39 = scmp.ne.s32.totalorder %s28, %s31
      %p40 = scmp.eq.s32.totalorder %s23, 1
      %p41 = por %p39, %p40
      %p42 = scmp.ne.s32.totalorder %s31, %s32
      %p43 = scmp.eq.s32.totalorder %s23, 0
      %p44 = por %p42, %p43
      %p45 = scmp.ne.s32.totalorder %s31, %s32
      %p46 = scmp.eq.s32.totalorder %s24, 1
      %p47 = por %p45, %p46
      %p49 = scmp.ne.s32.totalorder %s32, %s48
      %p50 = scmp.eq.s32.totalorder %s24, 0
      %p51 = por %p49, %p50
      %s53 = sadd.s32 %s52, 1
      %p56 = scmp.eq.s32.totalorder %s18, 1
      %p57 = scmp.ne.s32.totalorder %s52, %s54
      %p58 = scmp.eq.s32.totalorder %s18, 0
      %p59 = por %p57, %p58
      %p60 = scmp.ne.s32.totalorder %s52, %s54
      %p61 = scmp.eq.s32.totalorder %s23, 1
      %p62 = por %p60, %p61
      %p63 = scmp.ne.s32.totalorder %s54, %s55
      %p64 = scmp.eq.s32.totalorder %s23, 0
      %p65 = por %p63, %p64
      %p66 = scmp.ne.s32.totalorder %s54, %s55
      %p67 = scmp.eq.s32.totalorder %s24, 1
      %p68 = por %p66, %p67
      %p70 = scmp.ne.s32.totalorder %s55, %s69
      %p71 = scmp.eq.s32.totalorder %s24, 0
      %p72 = por %p70, %p71
      %s74 = sadd.s32 %s73, 1
      %p77 = scmp.eq.s32.totalorder %s18, 1
      %p78 = scmp.ne.s32.totalorder %s73, %s75
      %p79 = scmp.eq.s32.totalorder %s18, 0
      %p80 = por %p78, %p79
      %p81 = scmp.ne.s32.totalorder %s73, %s75
      %p82 = scmp.eq.s32.totalorder %s23, 1
      %p83 = por %p81, %p82
      %p84 = scmp.ne.s32.totalorder %s75, %s76
      %p85 = scmp.eq.s32.totalorder %s23, 0
      %p86 = por %p84, %p85
      %p87 = scmp.ne.s32.totalorder %s75, %s76
      %p88 = scmp.eq.s32.totalorder %s24, 1
      %p89 = por %p87, %p88
      %p91 = scmp.ne.s32.totalorder %s76, %s90
      %p92 = scmp.eq.s32.totalorder %s24, 0
      %p93 = por %p91, %p92
      %s95 = sadd.s32 %s94, 1
      %p98 = scmp.eq.s32.totalorder %s18, 1
      %p99 = scmp.ne.s32.totalorder %s94, %s96
      %p100 = scmp.eq.s32.totalorder %s18, 0
      %p101 = por %p99, %p100
      %p102 = scmp.ne.s32.totalorder %s94, %s96
      %p103 = scmp.eq.s32.totalorder %s23, 1
      %p104 = por %p102, %p103
      %p105 = scmp.ne.s32.totalorder %s96, %s97
      %p106 = scmp.eq.s32.totalorder %s23, 0
      %p107 = por %p105, %p106
      %p108 = scmp.ne.s32.totalorder %s96, %s97
      %p109 = scmp.eq.s32.totalorder %s24, 1
      %p110 = por %p108, %p109
      %p112 = scmp.ne.s32.totalorder %s97, %s111
      %p113 = scmp.eq.s32.totalorder %s24, 0
      %p114 = por %p112, %p113
      %s116 = sadd.s32 %s115, 1
      %p119 = scmp.eq.s32.totalorder %s18, 1
      %p120 = scmp.ne.s32.totalorder %s115, %s117
      %p121 = scmp.eq.s32.totalorder %s18, 0
      %p122 = por %p120, %p121
      %p123 = scmp.ne.s32.totalorder %s115, %s117
      %p124 = scmp.eq.s32.totalorder %s23, 1
      %p125 = por %p123, %p124
      %p126 = scmp.ne.s32.totalorder %s117, %s118
      %p127 = scmp.eq.s32.totalorder %s23, 0
      %p128 = por %p126, %p127
      %p129 = scmp.ne.s32.totalorder %s117, %s118
      %p130 = scmp.eq.s32.totalorder %s24, 1
      %p131 = por %p129, %p130
      %p133 = scmp.ne.s32.totalorder %s118, %s132
      %p134 = scmp.eq.s32.totalorder %s24, 0
      %p135 = por %p133, %p134
      %s137 = sadd.s32 %s136, 1
      %p140 = scmp.eq.s32.totalorder %s18, 1
      %p141 = scmp.ne.s32.totalorder %s136, %s138
      %p142 = scmp.eq.s32.totalorder %s18, 0
      %p143 = por %p141, %p142
      %p144 = scmp.ne.s32.totalorder %s136, %s138
      %p145 = scmp.eq.s32.totalorder %s23, 1
      %p146 = por %p144, %p145
      %p147 = scmp.ne.s32.totalorder %s138, %s139
      %p148 = scmp.eq.s32.totalorder %s23, 0
      %p149 = por %p147, %p148
      %p150 = scmp.ne.s32.totalorder %s138, %s139
      %p151 = scmp.eq.s32.totalorder %s24, 1
      %p152 = por %p150, %p151
      %p154 = scmp.ne.s32.totalorder %s139, %s153
      %p155 = scmp.eq.s32.totalorder %s24, 0
      %p156 = por %p154, %p155
      %s158 = sadd.s32 %s157, 1
      %p161 = scmp.eq.s32.totalorder %s18, 1
      %p162 = scmp.ne.s32.totalorder %s157, %s159
      %p163 = scmp.eq.s32.totalorder %s18, 0
      %p164 = por %p162, %p163
      %p165 = scmp.ne.s32.totalorder %s157, %s159
      %p166 = scmp.eq.s32.totalorder %s23, 1
      %p167 = por %p165, %p166
      %p168 = scmp.ne.s32.totalorder %s159, %s160
      %p169 = scmp.eq.s32.totalorder %s23, 0
      %p170 = por %p168, %p169
      %p171 = scmp.ne.s32.totalorder %s159, %s160
      %p172 = scmp.eq.s32.totalorder %s24, 1
      %p173 = por %p171, %p172
      %p175 = scmp.ne.s32.totalorder %s160, %s174
      %p176 = scmp.eq.s32.totalorder %s24, 0
      %p177 = por %p175, %p176
      %s178 = ssub.s32 %s18, %s25
      %p179 = scmp.eq.s32.totalorder %s178, 0
      %s181 = sadd.s32 %s180, 1
      %s182 = scalar_select %p179, %s180, %s181
      %p185 = pneg %p179
      %p186 = scmp.eq.s32.totalorder %s18, 1
      %p187 = por %p185, %p186
      %p188 = scmp.ne.s32.totalorder %s180, %s183
      %p189 = scmp.eq.s32.totalorder %s18, 0
      %p190 = por %p188, %p189
      %p191 = scmp.ne.s32.totalorder %s180, %s183
      %p192 = scmp.eq.s32.totalorder %s23, 1
      %p193 = por %p191, %p192
      %p194 = scmp.ne.s32.totalorder %s183, %s184
      %p195 = scmp.eq.s32.totalorder %s23, 0
      %p196 = por %p194, %p195
      %p197 = scmp.ne.s32.totalorder %s183, %s184
      %p198 = scmp.eq.s32.totalorder %s24, 1
      %p199 = por %p197, %p198
      %p201 = scmp.ne.s32.totalorder %s184, %s200
      %p202 = scmp.eq.s32.totalorder %s24, 0
      %p203 = por %p201, %p202
      %p204 = scmp.le.s32.totalorder 1, %s18
      %p205 = scmp.lt.s32.totalorder %s18, 3
      %p206 = pnand %p204, %p205
      %p207 = pneg %p206
      // Predicated region
      $region9: #{tpu_custom_call.1} parent=5 // pred_check
        _
      $region10: #{tpu_custom_call.1} parent=5 // pred_check_branch
        %209 = sbr.rel (%p206) target = $region12
      $region11: #{tpu_custom_call.1} parent=5 // pred_region
        %s210 = ssub.s32 %s18, 1
        // Predicated region
        $region13: #{tpu_custom_call.1} parent=11 // pred_check
          %p211 = pneg %p65
        $region14: #{tpu_custom_call.1} parent=11 // pred_check_branch
          %213 = sbr.rel (%p211) target = $region16
        $region15: #{tpu_custom_call.1} parent=11 // pred_region
          _
        $region16: #{tpu_custom_call.1} parent=11 // pred_fallthru
          _
        // Predicated region
        $region17: #{tpu_custom_call.1} parent=11 // pred_check
          %p214 = pneg %p86
        $region18: #{tpu_custom_call.1} parent=11 // pred_check_branch
          %216 = sbr.rel (%p214) target = $region20
        $region19: #{tpu_custom_call.1} parent=11 // pred_region
          _
        $region20: #{tpu_custom_call.1} parent=11 // pred_fallthru
          _
        // Predicated region
        $region21: #{tpu_custom_call.1} parent=11 // pred_check
          %p217 = pneg %p107
        $region22: #{tpu_custom_call.1} parent=11 // pred_check_branch
          %219 = sbr.rel (%p217) target = $region24
        $region23: #{tpu_custom_call.1} parent=11 // pred_region
          _
        $region24: #{tpu_custom_call.1} parent=11 // pred_fallthru
          _
        // Predicated region
        $region25: #{tpu_custom_call.1} parent=11 // pred_check
          %p220 = pneg %p128
        $region26: #{tpu_custom_call.1} parent=11 // pred_check_branch
          %222 = sbr.rel (%p220) target = $region28
        $region27: #{tpu_custom_call.1} parent=11 // pred_region
          _
        $region28: #{tpu_custom_call.1} parent=11 // pred_fallthru
          _
        // Predicated region
        $region29: #{tpu_custom_call.1} parent=11 // pred_check
          %p223 = pneg %p149
        $region30: #{tpu_custom_call.1} parent=11 // pred_check_branch
          %225 = sbr.rel (%p223) target = $region32
        $region31: #{tpu_custom_call.1} parent=11 // pred_region
          _
        $region32: #{tpu_custom_call.1} parent=11 // pred_fallthru
          _
        // Predicated region
        $region33: #{tpu_custom_call.1} parent=11 // pred_check
          %p226 = pneg %p170
        $region34: #{tpu_custom_call.1} parent=11 // pred_check_branch
          %228 = sbr.rel (%p226) target = $region36
        $region35: #{tpu_custom_call.1} parent=11 // pred_region
          _
        $region36: #{tpu_custom_call.1} parent=11 // pred_fallthru
          _
      $region12: #{tpu_custom_call.1} parent=5 // pred_fallthru
        _
      %p229 = scmp.lt.s32.totalorder %s18, 2
      // Predicated region
      $region37: #{tpu_custom_call.1} parent=5 // pred_check
        %p230 = pneg %p229
      $region38: #{tpu_custom_call.1} parent=5 // pred_check_branch
        %232 = sbr.rel (%p230) target = $region40
      $region39: #{tpu_custom_call.1} parent=5 // pred_region
        // Predicated region
        $region41: #{tpu_custom_call.1} parent=39 // pred_check
          %p233 = pneg %p38
        $region42: #{tpu_custom_call.1} parent=39 // pred_check_branch
          %235 = sbr.rel (%p233) target = $region44
        $region43: #{tpu_custom_call.1} parent=39 // pred_region
          %p236 = scmp.lt.s32.totalorder %s18, 1
          %s237 = scalar_select %p236, %s18, 1
          %s238 = smul.addr %s237, 4
          %s239 = scalar_lea.vmem %s0, %s238
        $region44: #{tpu_custom_call.1} parent=39 // pred_fallthru
          _
      $region40: #{tpu_custom_call.1} parent=5 // pred_fallthru
        _
      %p240 = scmp.le.s32.totalorder 1, %s18
      %p241 = scmp.lt.s32.totalorder %s18, 3
      %p242 = pnand %p240, %p241
      %p243 = pneg %p242
      // Predicated region
      $region45: #{tpu_custom_call.1} parent=5 // pred_check
        _
      $region46: #{tpu_custom_call.1} parent=5 // pred_check_branch
        %245 = sbr.rel (%p242) target = $region48
      $region47: #{tpu_custom_call.1} parent=5 // pred_region
        %s246 = ssub.s32 %s18, 1
        %p247 = scmp.lt.s32.totalorder %s23, 1
        %s248 = scalar_select %p247, %s23, 1
        %s249 = smul.addr %s248, 4
        %s250 = scalar_lea.vmem %s0, %s249
        %p251 = pneg %p44
        %p252 = pneg %p41
        %p253 = pneg %p65
        %p254 = pneg %p62
        %p255 = pneg %p86
        %p256 = pneg %p83
        %p257 = pneg %p107
        %p258 = pneg %p104
        %p259 = pneg %p128
        %p260 = pneg %p125
        %p261 = pneg %p149
        %p262 = pneg %p146
        %p263 = pneg %p170
        %p264 = pneg %p167
        %p265 = pneg %p196
        %p266 = pneg %p193
        %s267 = sand.u32 %s183, 1
        %s268 = scalar_lea.sflag [#allocation4], %s267
        %s269 = sand.u32 %s183, 1
        %s270 = scalar_lea.vmem [#allocation3], %s269
        %p271 = scmp.lt.s32.totalorder %s23, 1
        %s272 = scalar_select %p271, %s23, 1
        %s273 = smul.addr %s272, 4
        %s274 = scalar_lea.vmem %s0, %s273
        %v275 = vld [vmem:[%s274] sm:$0x7]
        %v276 = vld [vmem:[%s1] sm:$0xff]
        %v277 = vld [vmem:[%s1 + $0x8] sm:$0xff]
        %v278 = vld [vmem:[%s1 + $0x10] sm:$0xff]
        %v279 = vld [vmem:[%s1 + $0x18] sm:$0xff]
        %v280 = vld [vmem:[%s2] sm:$0xff]
        %v281 = vld [vmem:[%s2 + $0x8] sm:$0xff]
        %v282 = vld [vmem:[%s2 + $0x10] sm:$0xff]
        %v283 = vld [vmem:[%s2 + $0x18] sm:$0xff]
        %285 = vset.pattern.permute.xlu0 0
        %286 = vperm.xlu0 %285, %v280
        %v287 = vpop.permute.xlu0 %286
        %290 = vset.pattern.permute.xlu0 0
        %291 = vperm.xlu0 %290, %v281
        %v292 = vpop.permute.xlu0 %291
        %295 = vset.pattern.permute.xlu0 0
        %296 = vperm.xlu0 %295, %v282
        %v297 = vpop.permute.xlu0 %296
        %300 = vset.pattern.permute.xlu0 0
        %301 = vperm.xlu0 %300, %v283
        %v302 = vpop.permute.xlu0 %301
        %vm304 = vcmask 23552
        %v306 = vsel %vm304, %v276, 0
        %v309 = vsel %vm304, %v277, 0
        %v312 = vsel %vm304, %v278, 0
        %v315 = vsel %vm304, %v279, 0
        %vm317 = vcmask 1042432
        %v319 = vsel %vm317, %v275, 0
        %321 = vmatprep.subr.mxu0 0.0
        %322 = vmatpush1.msra.mxu0 0.0
        %323 = vmatprep.subr.mxu0 0.0
        %324 = vmatpush1.msra.mxu0 0.0
        %325 = vmatprep.subr.mxu0 0.0
        %326 = vmatpush1.msra.mxu0 0.0
        %327 = vmatprep.subr.mxu0 0.0
        %328 = vmatpush1.msra.mxu0 0.0
        %329 = vmatprep.subr.mxu0 0.0
        %330 = vmatpush1.msra.mxu0 0.0
        %331 = vmatprep.subr.mxu0 0.0
        %332 = vmatpush1.msra.mxu0 0.0
        %333 = vmatprep.subr.mxu0 0.0
        %334 = vmatpush1.msra.mxu0 0.0
        %335 = vmatprep.subr.mxu0 0.0
        %336 = vmatpush1.msra.mxu0 0.0
        %337 = vmatprep.subr.mxu0 0.0
        %338 = vmatpush1.msra.mxu0 0.0
        %339 = vmatprep.subr.mxu0 0.0
        %340 = vmatpush1.msra.mxu0 0.0
        %341 = vmatprep.subr.mxu0 0.0
        %342 = vmatpush1.msra.mxu0 0.0
        %343 = vmatprep.subr.mxu0 0.0
        %344 = vmatpush1.msra.mxu0 0.0
        %345 = vmatprep.subr.mxu0 0.0
        %346 = vmatpush1.msra.mxu0 0.0
        %347 = vmatprep.subr.mxu0 0.0
        %348 = vmatpush1.msra.mxu0 0.0
        %349 = vmatprep.subr.mxu0 0.0
        %350 = vmatpush1.msra.mxu0 0.0
        %351 = vmatprep.subr.mxu0 0.0
        %352 = vmatpush1.msra.mxu0 %v319
        %353 = vmatprep.subr.mxu0 0.0
        %354 = vmatpush2.msra.mxu0 0.0
        %355 = vmatprep.subr.mxu0 0.0
        %356 = vmatpush2.msra.mxu0 0.0
        %357 = vmatprep.subr.mxu0 0.0
        %358 = vmatpush2.msra.mxu0 0.0
        %359 = vmatprep.subr.mxu0 0.0
        %360 = vmatpush2.msra.mxu0 0.0
        %361 = vmatprep.subr.mxu0 0.0
        %362 = vmatpush2.msra.mxu0 0.0
        %363 = vmatprep.subr.mxu0 0.0
        %364 = vmatpush2.msra.mxu0 0.0
        %365 = vmatprep.subr.mxu0 0.0
        %366 = vmatpush2.msra.mxu0 0.0
        %367 = vmatprep.subr.mxu0 0.0
        %368 = vmatpush2.msra.mxu0 0.0
        %369 = vmatprep.subr.mxu0 0.0
        %370 = vmatpush2.msra.mxu0 0.0
        %371 = vmatprep.subr.mxu0 0.0
        %372 = vmatpush2.msra.mxu0 0.0
        %373 = vmatprep.subr.mxu0 0.0
        %374 = vmatpush2.msra.mxu0 0.0
        %375 = vmatprep.subr.mxu0 0.0
        %376 = vmatpush2.msra.mxu0 0.0
        %377 = vmatprep.subr.mxu0 0.0
        %378 = vmatpush2.msra.mxu0 0.0
        %379 = vmatprep.subr.mxu0 0.0
        %380 = vmatpush2.msra.mxu0 0.0
        %381 = vmatprep.subr.mxu0 0.0
        %382 = vmatpush2.msra.mxu0 0.0
        %383 = vmatprep.subr.mxu0 0.0
        %384 = vmatpush2.msra.mxu0 0.0
        %385 = vmatprep.mubr.f32.mxu0 0.0
        %386 = vmatmul.mubr.f32.gmra.mxu0 %v306
        %v387 = vpop.f32.mrf.mxu0
        %v388 = vadd.f32 %v287, %v387
        %v389 = vpop.f32.mrf.mxu0
        %390 = vmatprep.mubr.f32.mxu0 0.0
        %391 = vmatmul.mubr.f32.gmra.mxu0 %v309
        %v392 = vpop.f32.mrf.mxu0
        %v393 = vadd.f32 %v292, %v392
        %v394 = vpop.f32.mrf.mxu0
        %395 = vmatprep.mubr.f32.mxu0 0.0
        %396 = vmatmul.mubr.f32.gmra.mxu0 %v312
        %v397 = vpop.f32.mrf.mxu0
        %v398 = vadd.f32 %v297, %v397
        %v399 = vpop.f32.mrf.mxu0
        %400 = vmatprep.mubr.f32.mxu0 0.0
        %401 = vmatmul.mubr.f32.gmra.mxu0 %v315
        %v402 = vpop.f32.mrf.mxu0
        %v403 = vadd.f32 %v302, %v402
        %v404 = vpop.f32.mrf.mxu0
        %405 = vdwg.mxu0
        %v406 = vmax.f32 %v388, 0.0
        %v407 = vmax.f32 %v393, 0.0
        %v408 = vmax.f32 %v398, 0.0
        %v409 = vmax.f32 %v403, 0.0
        %v410 = vld [vmem:[%s3] sm:$0xff]
        %v411 = vld [vmem:[%s3 + $0x8] sm:$0xff]
        %v412 = vld [vmem:[%s3 + $0x10] sm:$0xff]
        %v413 = vld [vmem:[%s3 + $0x18] sm:$0xff]
        %v414 = vld [vmem:[%s4] sm:$0xff]
        %v415 = vld [vmem:[%s4 + $0x8] sm:$0xff]
        %v416 = vld [vmem:[%s4 + $0x10] sm:$0xff]
        %v417 = vld [vmem:[%s4 + $0x18] sm:$0xff]
        %419 = vset.pattern.permute.xlu0 0
        %420 = vperm.xlu0 %419, %v414
        %v421 = vpop.permute.xlu0 %420
        %424 = vset.pattern.permute.xlu0 0
        %425 = vperm.xlu0 %424, %v415
        %v426 = vpop.permute.xlu0 %425
        %429 = vset.pattern.permute.xlu0 0
        %430 = vperm.xlu0 %429, %v416
        %v431 = vpop.permute.xlu0 %430
        %434 = vset.pattern.permute.xlu0 0
        %435 = vperm.xlu0 %434, %v417
        %v436 = vpop.permute.xlu0 %435
        %vm438 = vcmask 261120
        %v440 = vsel %vm438, %v410, 0
        %v443 = vsel %vm438, %v411, 0
        %v446 = vsel %vm438, %v412, 0
        %v449 = vsel %vm438, %v413, 0
        %451 = vmatprep.subr.mxu0 0.0
        %452 = vmatpush1.msra.mxu0 0.0
        %453 = vmatprep.subr.mxu0 0.0
        %454 = vmatpush1.msra.mxu0 0.0
        %455 = vmatprep.subr.mxu0 0.0
        %456 = vmatpush1.msra.mxu0 0.0
        %457 = vmatprep.subr.mxu0 0.0
        %458 = vmatpush1.msra.mxu0 0.0
        %459 = vmatprep.subr.mxu0 0.0
        %460 = vmatpush1.msra.mxu0 0.0
        %461 = vmatprep.subr.mxu0 0.0
        %462 = vmatpush1.msra.mxu0 0.0
        %463 = vmatprep.subr.mxu0 0.0
        %464 = vmatpush1.msra.mxu0 0.0
        %465 = vmatprep.subr.mxu0 0.0
        %466 = vmatpush1.msra.mxu0 0.0
        %467 = vmatprep.subr.mxu0 0.0
        %468 = vmatpush1.msra.mxu0 0.0
        %469 = vmatprep.subr.mxu0 0.0
        %470 = vmatpush1.msra.mxu0 0.0
        %471 = vmatprep.subr.mxu0 0.0
        %472 = vmatpush1.msra.mxu0 0.0
        %473 = vmatprep.subr.mxu0 0.0
        %474 = vmatpush1.msra.mxu0 0.0
        %475 = vmatprep.subr.mxu0 0.0
        %476 = vmatpush1.msra.mxu0 %v409
        %477 = vmatprep.subr.mxu0 0.0
        %478 = vmatpush1.msra.mxu0 %v408
        %479 = vmatprep.subr.mxu0 0.0
        %480 = vmatpush1.msra.mxu0 %v407
        %481 = vmatprep.subr.mxu0 0.0
        %482 = vmatpush1.msra.mxu0 %v406
        %483 = vmatprep.subr.mxu0 0.0
        %484 = vmatpush2.msra.mxu0 0.0
        %485 = vmatprep.subr.mxu0 0.0
        %486 = vmatpush2.msra.mxu0 0.0
        %487 = vmatprep.subr.mxu0 0.0
        %488 = vmatpush2.msra.mxu0 0.0
        %489 = vmatprep.subr.mxu0 0.0
        %490 = vmatpush2.msra.mxu0 0.0
        %491 = vmatprep.subr.mxu0 0.0
        %492 = vmatpush2.msra.mxu0 0.0
        %493 = vmatprep.subr.mxu0 0.0
        %494 = vmatpush2.msra.mxu0 0.0
        %495 = vmatprep.subr.mxu0 0.0
        %496 = vmatpush2.msra.mxu0 0.0
        %497 = vmatprep.subr.mxu0 0.0
        %498 = vmatpush2.msra.mxu0 0.0
        %499 = vmatprep.subr.mxu0 0.0
        %500 = vmatpush2.msra.mxu0 0.0
        %501 = vmatprep.subr.mxu0 0.0
        %502 = vmatpush2.msra.mxu0 0.0
        %503 = vmatprep.subr.mxu0 0.0
        %504 = vmatpush2.msra.mxu0 0.0
        %505 = vmatprep.subr.mxu0 0.0
        %506 = vmatpush2.msra.mxu0 0.0
        %507 = vmatprep.subr.mxu0 0.0
        %508 = vmatpush2.msra.mxu0 0.0
        %509 = vmatprep.subr.mxu0 0.0
        %510 = vmatpush2.msra.mxu0 0.0
        %511 = vmatprep.subr.mxu0 0.0
        %512 = vmatpush2.msra.mxu0 0.0
        %513 = vmatprep.subr.mxu0 0.0
        %514 = vmatpush2.msra.mxu0 0.0
        %515 = vmatprep.mubr.f32.mxu0 0.0
        %516 = vmatmul.mubr.f32.gmra.mxu0 %v440
        %v517 = vpop.f32.mrf.mxu0
        %v518 = vadd.f32 %v421, %v517
        %v519 = vpop.f32.mrf.mxu0
        %520 = vmatprep.mubr.f32.mxu0 0.0
        %521 = vmatmul.mubr.f32.gmra.mxu0 %v443
        %v522 = vpop.f32.mrf.mxu0
        %v523 = vadd.f32 %v426, %v522
        %v524 = vpop.f32.mrf.mxu0
        %525 = vmatprep.mubr.f32.mxu0 0.0
        %526 = vmatmul.mubr.f32.gmra.mxu0 %v446
        %v527 = vpop.f32.mrf.mxu0
        %v528 = vadd.f32 %v431, %v527
        %v529 = vpop.f32.mrf.mxu0
        %530 = vmatprep.mubr.f32.mxu0 0.0
        %531 = vmatmul.mubr.f32.gmra.mxu0 %v449
        %v532 = vpop.f32.mrf.mxu0
        %v533 = vadd.f32 %v436, %v532
        %v534 = vpop.f32.mrf.mxu0
        %535 = vdwg.mxu0
        %v536 = vmax.f32 %v518, 0.0
        %v537 = vmax.f32 %v523, 0.0
        %v538 = vmax.f32 %v528, 0.0
        %v539 = vmax.f32 %v533, 0.0
        %v540 = vld [vmem:[%s5] sm:$0x1]
        %v541 = vld [vmem:[#allocation2] sm:$0x1]
        %543 = vset.pattern.permute.xlu0 0
        %544 = vperm.xlu0 %543, %v541
        %v545 = vpop.permute.xlu0 %544
        %v547 = vlaneseq
        %v548 = vshrl.u32 %v547, 7
        %v549 = vsub.s32 0, %v548
        %v550 = vrot.slane %v545, %v549
        %v552 = vsel %vm438, %v540, 0
        %554 = vmatprep.subr.mxu0 0.0
        %555 = vmatpush1.msra.mxu0 0.0
        %556 = vmatprep.subr.mxu0 0.0
        %557 = vmatpush1.msra.mxu0 0.0
        %558 = vmatprep.subr.mxu0 0.0
        %559 = vmatpush1.msra.mxu0 0.0
        %560 = vmatprep.subr.mxu0 0.0
        %561 = vmatpush1.msra.mxu0 0.0
        %562 = vmatprep.subr.mxu0 0.0
        %563 = vmatpush1.msra.mxu0 0.0
        %564 = vmatprep.subr.mxu0 0.0
        %565 = vmatpush1.msra.mxu0 0.0
        %566 = vmatprep.subr.mxu0 0.0
        %567 = vmatpush1.msra.mxu0 0.0
        %568 = vmatprep.subr.mxu0 0.0
        %569 = vmatpush1.msra.mxu0 0.0
        %570 = vmatprep.subr.mxu0 0.0
        %571 = vmatpush1.msra.mxu0 0.0
        %572 = vmatprep.subr.mxu0 0.0
        %573 = vmatpush1.msra.mxu0 0.0
        %574 = vmatprep.subr.mxu0 0.0
        %575 = vmatpush1.msra.mxu0 0.0
        %576 = vmatprep.subr.mxu0 0.0
        %577 = vmatpush1.msra.mxu0 0.0
        %578 = vmatprep.subr.mxu0 0.0
        %579 = vmatpush1.msra.mxu0 %v539
        %580 = vmatprep.subr.mxu0 0.0
        %581 = vmatpush1.msra.mxu0 %v538
        %582 = vmatprep.subr.mxu0 0.0
        %583 = vmatpush1.msra.mxu0 %v537
        %584 = vmatprep.subr.mxu0 0.0
        %585 = vmatpush1.msra.mxu0 %v536
        %586 = vmatprep.subr.mxu0 0.0
        %587 = vmatpush2.msra.mxu0 0.0
        %588 = vmatprep.subr.mxu0 0.0
        %589 = vmatpush2.msra.mxu0 0.0
        %590 = vmatprep.subr.mxu0 0.0
        %591 = vmatpush2.msra.mxu0 0.0
        %592 = vmatprep.subr.mxu0 0.0
        %593 = vmatpush2.msra.mxu0 0.0
        %594 = vmatprep.subr.mxu0 0.0
        %595 = vmatpush2.msra.mxu0 0.0
        %596 = vmatprep.subr.mxu0 0.0
        %597 = vmatpush2.msra.mxu0 0.0
        %598 = vmatprep.subr.mxu0 0.0
        %599 = vmatpush2.msra.mxu0 0.0
        %600 = vmatprep.subr.mxu0 0.0
        %601 = vmatpush2.msra.mxu0 0.0
        %602 = vmatprep.subr.mxu0 0.0
        %603 = vmatpush2.msra.mxu0 0.0
        %604 = vmatprep.subr.mxu0 0.0
        %605 = vmatpush2.msra.mxu0 0.0
        %606 = vmatprep.subr.mxu0 0.0
        %607 = vmatpush2.msra.mxu0 0.0
        %608 = vmatprep.subr.mxu0 0.0
        %609 = vmatpush2.msra.mxu0 0.0
        %610 = vmatprep.subr.mxu0 0.0
        %611 = vmatpush2.msra.mxu0 0.0
        %612 = vmatprep.subr.mxu0 0.0
        %613 = vmatpush2.msra.mxu0 0.0
        %614 = vmatprep.subr.mxu0 0.0
        %615 = vmatpush2.msra.mxu0 0.0
        %616 = vmatprep.subr.mxu0 0.0
        %617 = vmatpush2.msra.mxu0 0.0
        %618 = vmatprep.mubr.f32.mxu0 0.0
        %619 = vmatmul.mubr.f32.gmra.mxu0 %v552
        %v620 = vpop.f32.mrf.mxu0
        %v621 = vadd.f32 %v550, %v620
        %v622 = vpop.f32.mrf.mxu0
        %623 = vdwg.mxu0
        %v624 = vxor.u32 %v621, 2147483648
        %v625 = vmul.f32 %v624, 1.442695
        %v626 = vpow.pop %v625
        %v627 = vadd.f32 %v626, 1.0
        %v628 = vrcp.pop %v627
        %v629 = vmul.f32 1.0, %v628
        %v630 = vmul.f32 %v629, 2.0
        %631 = vst [vmem:[%s270] sm:$0x1] %v630
        %s632 = sand.u32 %s183, 1
        %s633 = scalar_lea.sflag [#allocation4], %s632
        %s634 = sand.u32 %s183, 1
        %s635 = scalar_lea.vmem [#allocation3], %s634
        // Predicated region
        $region49: #{tpu_custom_call.1} parent=47 // pred_check
          %p636 = pneg %p193
        $region50: #{tpu_custom_call.1} parent=47 // pred_check_branch
          %638 = sbr.rel (%p636) target = $region52
        $region51: #{tpu_custom_call.1} parent=47 // pred_region
          %s640 = ssub.s32 16, 16
          %641 = vsyncadd %s633, %s640
          %s642 = smul.addr %s23, 16
          %s643 = scalar_lea.hbm %s7, %s642
          %s645 = sshll.u32 %s635, 4
          %s646 = int_to_ptr.vmem [resolvable:$true] %s645
          %648 = dma.vmem_to_hbm [thread:$0]  %s646, 16, %s643, %s633
        $region52: #{tpu_custom_call.1} parent=47 // pred_fallthru
          _
      $region48: #{tpu_custom_call.1} parent=5 // pred_fallthru
        _
      %p649 = scmp.le.s32.totalorder 2, %s18
      // Predicated region
      $region53: #{tpu_custom_call.1} parent=5 // pred_check
        %p650 = pneg %p649
      $region54: #{tpu_custom_call.1} parent=5 // pred_check_branch
        %652 = sbr.rel (%p650) target = $region56
      $region55: #{tpu_custom_call.1} parent=5 // pred_region
        %s653 = ssub.s32 %s18, 2
        // Predicated region
        $region57: #{tpu_custom_call.1} parent=55 // pred_check
          %p654 = pneg %p199
        $region58: #{tpu_custom_call.1} parent=55 // pred_check_branch
          %656 = sbr.rel (%p654) target = $region60
        $region59: #{tpu_custom_call.1} parent=55 // pred_region
          %s657 = sand.u32 %s184, 1
          %s658 = scalar_lea.sflag [#allocation4], %s657
          %s659 = sand.u32 %s184, 1
          %s660 = scalar_lea.vmem [#allocation3], %s659
          %661 = dma.done %s658, 16
        $region60: #{tpu_custom_call.1} parent=55 // pred_fallthru
          _
      $region56: #{tpu_custom_call.1} parent=5 // pred_fallthru
        _
    $region6: #{tpu_custom_call.1} parent=1 // loop_footer
      %s22 = sadd.s32 1, %s18
    $region7: #{tpu_custom_call.1} parent=1 // loop_footer_branch
      %17 = sbr.rel target = $region3
    $region8: #{tpu_custom_call.1} parent=1 // loop_exit
      _
    %662 = vsyncpa [#allocation4], 1
    %s663 = scalar_lea.sflag [#allocation4], 1
    %664 = vsyncpa %s663, 1

</llo_original>
